<compile_context>
chip_gen: v7x
topology: tpu7x:2x2x1
jax: 0.10.0
libtpu: 0.0.40
codegen_flags: <defaults>
</compile_context>

<pallas_src>
import jax
import jax.numpy as jnp
from jax.experimental import pallas as pl
from jax.experimental.pallas import tpu as pltpu


def _gat_kernel(adj_ref, z_ref, sdom_ref, srng_ref, out_ref):
    """One destination-row tile per grid step; all heads handled inside the body.

    adj_ref  : (TR, Np)        bf16 edge multiplicities (incl. self-loops), row tile
    z_ref    : (H, Np, n_out)  bf16 per-head projections (precomputed, resident)
    sdom_ref : (H, Np)         f32 per-node domain scores   (precomputed, resident)
    srng_ref : (TR, H)         f32 per-node range scores, row tile
    out_ref  : (TR, H*n_out)   f32 concatenated head outputs ('cat' merge)
    """
    n_heads = z_ref.shape[0]

    adj = adj_ref[...].astype(jnp.float32)             # (TR, Np) edge counts
    mask = adj > 0.0                                    # head-invariant, hoisted out of loop
    neg = jnp.float32(-1e30)
    sdom = sdom_ref[...]                                # (H, Np)
    srng = srng_ref[...]                                # (TR, H)

    head_outs = []
    for h in range(n_heads):                            # small, static unroll
        # e_ij = leaky_relu(z_d . a_dom + z_r . a_rng); the dot products were hoisted.
        e = srng[:, h:h + 1] + sdom[h:h + 1, :]         # (TR, Np)
        e = jnp.where(e >= 0.0, e, 0.01 * e)            # F.leaky_relu default slope
        e = jnp.where(mask, e, neg)

        # Per-destination softmax over incoming edges, weighted by edge multiplicity.
        m = jnp.max(e, axis=1, keepdims=True)           # (TR, 1)
        p = jnp.exp(e - m) * adj                        # masked lanes -> exp(-huge)*0 = 0
        denom = jnp.sum(p, axis=1, keepdims=True)       # >= 1 on real rows (self-loop)
        denom = jnp.maximum(denom, 1e-30)               # only hit on zero-padded rows
        alpha = p / denom                               # exact divide (approx recip failed tol)

        # out[r] = relu( sum_d alpha[r, d] * z_h[d] )  == index_add_ of alpha * domain_z.
        # bf16 MXU operands, f32 accumulation.
        head_outs.append(jnp.maximum(
            jnp.dot(alpha.astype(z_ref.dtype), z_ref[h],
                    preferred_element_type=jnp.float32), 0.0))

    # Single store of the concatenated ('cat' merge) head outputs.
    out_ref[...] = jnp.concatenate(head_outs, axis=1)


def _row_tile(n_nodes):
    """Destination-row tile: whole (8-padded) array when small, else a fixed 256.

    256 keeps the adjacency row tile DMA-efficient while bounding VMEM on v7x (64 MiB);
    awkward N no longer collapses to TR=8 — we pad N up to a multiple of the tile instead.
    """
    if n_nodes <= 512:
        return max(8, -(-n_nodes // 8) * 8)
    return 256


def multi_head_gat(node_features, adj_counts, w_stack, a_stack):
    """Runs all heads in one pallas_call; returns (N, n_heads*n_out)."""
    n_heads, f_in, n_out = w_stack.shape
    n_nodes = node_features.shape[0]
    n_cat = n_heads * n_out

    tr = _row_tile(n_nodes)
    n_pad = -(-n_nodes // tr) * tr

    x = node_features
    adj = adj_counts
    if n_pad != n_nodes:
        x = jnp.pad(x, ((0, n_pad - n_nodes), (0, 0)))
        adj = jnp.pad(adj, ((0, n_pad - n_nodes), (0, n_pad - n_nodes)))

    # --- Hoisted projection: one XLA matmul instead of once per grid step in the kernel. ---
    hi = jax.lax.Precision.HIGHEST
    w_cat = jnp.transpose(w_stack, (1, 0, 2)).reshape(f_in, n_cat)      # col block h == W_h
    z_all = jnp.dot(x, w_cat, precision=hi)                             # (Np, H*n_out) f32
    z_heads = jnp.transpose(z_all.reshape(n_pad, n_heads, n_out),
                            (1, 0, 2))                                  # (H, Np, n_out)

    # --- Hoisted attention scores (per node, per head), f32, no in-kernel transposes. ---
    s_dom = jnp.sum(z_heads * a_stack[:, 0, :][:, None, :], axis=-1)    # (H, Np) lane-major
    s_rng = jnp.sum(z_heads * a_stack[:, 1, :][:, None, :], axis=-1).T  # (Np, H) row-tiled

    grid = (n_pad // tr,)

    out = pl.pallas_call(
        _gat_kernel,
        out_shape=jax.ShapeDtypeStruct((n_pad, n_cat), jnp.float32),
        grid_spec=pltpu.PrefetchScalarGridSpec(
            num_scalar_prefetch=0,
            grid=grid,
            in_specs=[
                pl.BlockSpec((tr, n_pad), lambda r: (r, 0)),                  # adjacency tile
                pl.BlockSpec((n_heads, n_pad, n_out), lambda r: (0, 0, 0)),   # z (resident)
                pl.BlockSpec((n_heads, n_pad), lambda r: (0, 0)),             # s_dom (resident)
                pl.BlockSpec((tr, n_heads), lambda r: (r, 0)),                # s_rng tile
            ],
            out_specs=pl.BlockSpec((tr, n_cat), lambda r: (r, 0)),            # concatenated heads
        ),
        compiler_params=pltpu.CompilerParams(
            dimension_semantics=("parallel",),     # disjoint output row tiles -> megacore-safe
            vmem_limit_bytes=32 * 1024 * 1024,     # explicit budget; fits v5e/v6e/v7x scoped VMEM
        ),
    )(
        # bf16 adjacency: exact for integer multiplicities <= 256 (use int8 on v5e if <= 127).
        adj.astype(jnp.bfloat16),
        z_heads.astype(jnp.bfloat16),              # bf16 MXU operand, f32 accumulation
        s_dom,
        s_rng,
    )
    return out[:n_nodes]


def _reference(node_features, adj_counts, w_stack, a_stack):
    """Pure-JAX reference mirroring the PyTorch forward semantics (dense form, full f32)."""
    hi = jax.lax.Precision.HIGHEST
    outs = []
    for h in range(w_stack.shape[0]):
        z = jnp.dot(node_features, w_stack[h], precision=hi)
        s = jnp.dot(z, a_stack[h].T, precision=hi)
        e = s[:, 1:2] + s[:, 0:1].T
        e = jnp.where(e >= 0.0, e, 0.01 * e)
        mask = adj_counts > 0.0
        m = jnp.max(jnp.where(mask, e, -jnp.inf), axis=1, keepdims=True)
        p = jnp.where(mask, jnp.exp(e - m) * adj_counts, 0.0)
        alpha = p / jnp.sum(p, axis=1, keepdims=True)
        outs.append(jax.nn.relu(jnp.dot(alpha, z, precision=hi)))
    return jnp.concatenate(outs, axis=1)


if __name__ == "__main__":
    key = jax.random.PRNGKey(0)
    k_x, k_ed, k_er, k_w, k_a = jax.random.split(key, 5)

    n_nodes, n_features, n_output, n_heads, n_edges = 16, 8, 8, 2, 24

    # Node features and a random edge list (domain -> range).
    x = jax.random.normal(k_x, (n_nodes, n_features), dtype=jnp.float32)
    edge_domain = jax.random.randint(k_ed, (n_edges,), 0, n_nodes)
    edge_range = jax.random.randint(k_er, (n_edges,), 0, n_nodes)

    # Dense multiplicity matrix adj[r, d]; add the self-loops GATLayer inserts.
    adj = jnp.zeros((n_nodes, n_nodes), jnp.float32)
    adj = adj.at[edge_range, edge_domain].add(1.0)
    adj = adj + jnp.eye(n_nodes, dtype=jnp.float32)

    # Deterministic per-head parameters (xavier-uniform-like, gain=sqrt(2) for relu).
    gain = jnp.sqrt(2.0)
    w_bound = gain * jnp.sqrt(6.0 / (n_features + n_output))
    a_bound = gain * jnp.sqrt(6.0 / (2 * n_output + 1))
    # W stored as (F, n_out) so z = x @ W  (torch Linear stores the transpose).
    w_stack = jax.random.uniform(
        k_w, (n_heads, n_features, n_output), jnp.float32, -w_bound, w_bound)
    # a.weight (1, 2*n_out) split into (a_dom, a_rng) -> (n_heads, 2, n_out).
    a_stack = jax.random.uniform(
        k_a, (n_heads, 2, n_output), jnp.float32, -a_bound, a_bound)

    out = multi_head_gat(x, adj, w_stack, a_stack)
    out = jax.block_until_ready(out)

    ref = _reference(x, adj, w_stack, a_stack)
    assert out.shape == (n_nodes, n_heads * n_output)
    # Tolerance reflects the bf16 MXU operands of the in-kernel aggregation matmul
    # (relative rounding <= 2^-9 per operand, f32 accumulation); softmax itself is exact f32.
    assert jnp.allclose(out, ref, atol=2e-2, rtol=1e-2), float(jnp.max(jnp.abs(out - ref)))
    print("KERNEL_OK")
</pallas_src>

<mosaic_0001>
module attributes {stable_mosaic.version = 11 : i64} {
  func.func @_gat_kernel(%arg0: i32, %arg1: memref<16x16xbf16, #tpu.memory_space<vmem>>, %arg2: memref<2x16x8xbf16, #tpu.memory_space<vmem>>, %arg3: memref<2x16xf32, #tpu.memory_space<vmem>>, %arg4: memref<16x2xf32, #tpu.memory_space<vmem>>, %arg5: memref<16x16xf32, #tpu.memory_space<vmem>>) attributes {dimension_semantics = [#tpu.dimension_semantics<parallel>], iteration_bounds = array<i64: 1>, scalar_prefetch = 0 : i64, scratch_operands = 0 : i64, tpu.core_type = #tpu.core_type<tc>, window_params = [{transform_indices = @transform_0, window_bounds = array<i64: 16, 16>}, {pipeline_mode = #tpu.pipeline_mode<synchronous>, transform_indices = @transform_1, window_bounds = array<i64: 2, 16, 8>}, {pipeline_mode = #tpu.pipeline_mode<synchronous>, transform_indices = @transform_2, window_bounds = array<i64: 2, 16>}, {transform_indices = @transform_3, window_bounds = array<i64: 16, 2>}, {transform_indices = @transform_4, window_bounds = array<i64: 16, 16>}]} {
    %c0 = arith.constant 0 : index
    %c0_0 = arith.constant 0 : index
    %0 = vector.load %arg1[%c0, %c0_0] : memref<16x16xbf16, #tpu.memory_space<vmem>>, vector<16x16xbf16>
    %1 = arith.extf %0 : vector<16x16xbf16> to vector<16x16xf32>
    %cst = arith.constant 0.000000e+00 : f32
    %2 = vector.broadcast %cst : f32 to vector<16x16xf32>
    %3 = arith.cmpf ogt, %1, %2 : vector<16x16xf32>
    %c0_1 = arith.constant 0 : index
    %c0_2 = arith.constant 0 : index
    %4 = vector.load %arg3[%c0_1, %c0_2] : memref<2x16xf32, #tpu.memory_space<vmem>>, vector<2x16xf32>
    %c0_3 = arith.constant 0 : index
    %c0_4 = arith.constant 0 : index
    %5 = vector.load %arg4[%c0_3, %c0_4] : memref<16x2xf32, #tpu.memory_space<vmem>>, vector<16x2xf32>
    %6 = vector.extract_strided_slice %5 {offsets = [0, 0], sizes = [16, 1], strides = [1, 1]} : vector<16x2xf32> to vector<16x1xf32>
    %7 = vector.extract_strided_slice %4 {offsets = [0, 0], sizes = [1, 16], strides = [1, 1]} : vector<2x16xf32> to vector<1x16xf32>
    %8 = vector.broadcast %6 : vector<16x1xf32> to vector<16x16xf32>
    %9 = vector.broadcast %7 : vector<1x16xf32> to vector<16x16xf32>
    %10 = arith.addf %8, %9 : vector<16x16xf32>
    %cst_5 = arith.constant 0.000000e+00 : f32
    %11 = vector.broadcast %cst_5 : f32 to vector<16x16xf32>
    %12 = arith.cmpf oge, %10, %11 : vector<16x16xf32>
    %cst_6 = arith.constant 0.00999999977 : f32
    %13 = vector.broadcast %cst_6 : f32 to vector<16x16xf32>
    %14 = arith.mulf %13, %10 : vector<16x16xf32>
    %15 = arith.select %12, %10, %14 : vector<16x16xi1>, vector<16x16xf32>
    %cst_7 = arith.constant -1.000000e+30 : f32
    %16 = vector.broadcast %cst_7 : f32 to vector<16x16xf32>
    %17 = arith.select %3, %15, %16 : vector<16x16xi1>, vector<16x16xf32>
    %cst_8 = arith.constant dense<0xFF800000> : vector<16xf32>
    %18 = vector.multi_reduction <maximumf>, %17, %cst_8 [1] : vector<16x16xf32> to vector<16xf32>
    %19 = vector.shape_cast %18 : vector<16xf32> to vector<16x1xf32>
    %20 = vector.broadcast %19 : vector<16x1xf32> to vector<16x16xf32>
    %21 = arith.subf %17, %20 : vector<16x16xf32>
    %22 = math.exp %21 : vector<16x16xf32>
    %23 = arith.mulf %22, %1 : vector<16x16xf32>
    %cst_9 = arith.constant dense<0.000000e+00> : vector<16xf32>
    %24 = vector.multi_reduction <add>, %23, %cst_9 [1] : vector<16x16xf32> to vector<16xf32>
    %25 = vector.shape_cast %24 : vector<16xf32> to vector<16x1xf32>
    %cst_10 = arith.constant 1.000000e-30 : f32
    %26 = vector.broadcast %cst_10 : f32 to vector<16x1xf32>
    %27 = arith.maximumf %25, %26 : vector<16x1xf32>
    %28 = vector.broadcast %27 : vector<16x1xf32> to vector<16x16xf32>
    %29 = arith.divf %23, %28 : vector<16x16xf32>
    %30 = arith.truncf %29 : vector<16x16xf32> to vector<16x16xbf16>
    %c0_11 = arith.constant 0 : index
    %c0_12 = arith.constant 0 : index
    %c0_13 = arith.constant 0 : index
    %31 = vector.load %arg2[%c0_11, %c0_12, %c0_13] : memref<2x16x8xbf16, #tpu.memory_space<vmem>>, vector<1x16x8xbf16>
    %32 = vector.shape_cast %31 : vector<1x16x8xbf16> to vector<16x8xbf16>
    %cst_14 = arith.constant dense<0.000000e+00> : vector<16x8xf32>
    %33 = tpu.matmul %30, %32, %cst_14 {dimension_numbers = #tpu.dot_dimension_numbers<[1], [0], [0], [1], [0, 0, 1, 1], [], []>} : vector<16x16xbf16>, vector<16x8xbf16>, vector<16x8xf32> -> vector<16x8xf32>
    %cst_15 = arith.constant 0.000000e+00 : f32
    %34 = vector.broadcast %cst_15 : f32 to vector<16x8xf32>
    %35 = arith.maximumf %33, %34 : vector<16x8xf32>
    %36 = vector.extract_strided_slice %5 {offsets = [0, 1], sizes = [16, 1], strides = [1, 1]} : vector<16x2xf32> to vector<16x1xf32>
    %37 = vector.extract_strided_slice %4 {offsets = [1, 0], sizes = [1, 16], strides = [1, 1]} : vector<2x16xf32> to vector<1x16xf32>
    %38 = vector.broadcast %36 : vector<16x1xf32> to vector<16x16xf32>
    %39 = vector.broadcast %37 : vector<1x16xf32> to vector<16x16xf32>
    %40 = arith.addf %38, %39 : vector<16x16xf32>
    %cst_16 = arith.constant 0.000000e+00 : f32
    %41 = vector.broadcast %cst_16 : f32 to vector<16x16xf32>
    %42 = arith.cmpf oge, %40, %41 : vector<16x16xf32>
    %cst_17 = arith.constant 0.00999999977 : f32
    %43 = vector.broadcast %cst_17 : f32 to vector<16x16xf32>
    %44 = arith.mulf %43, %40 : vector<16x16xf32>
    %45 = arith.select %42, %40, %44 : vector<16x16xi1>, vector<16x16xf32>
    %cst_18 = arith.constant -1.000000e+30 : f32
    %46 = vector.broadcast %cst_18 : f32 to vector<16x16xf32>
    %47 = arith.select %3, %45, %46 : vector<16x16xi1>, vector<16x16xf32>
    %cst_19 = arith.constant dense<0xFF800000> : vector<16xf32>
    %48 = vector.multi_reduction <maximumf>, %47, %cst_19 [1] : vector<16x16xf32> to vector<16xf32>
    %49 = vector.shape_cast %48 : vector<16xf32> to vector<16x1xf32>
    %50 = vector.broadcast %49 : vector<16x1xf32> to vector<16x16xf32>
    %51 = arith.subf %47, %50 : vector<16x16xf32>
    %52 = math.exp %51 : vector<16x16xf32>
    %53 = arith.mulf %52, %1 : vector<16x16xf32>
    %cst_20 = arith.constant dense<0.000000e+00> : vector<16xf32>
    %54 = vector.multi_reduction <add>, %53, %cst_20 [1] : vector<16x16xf32> to vector<16xf32>
    %55 = vector.shape_cast %54 : vector<16xf32> to vector<16x1xf32>
    %cst_21 = arith.constant 1.000000e-30 : f32
    %56 = vector.broadcast %cst_21 : f32 to vector<16x1xf32>
    %57 = arith.maximumf %55, %56 : vector<16x1xf32>
    %58 = vector.broadcast %57 : vector<16x1xf32> to vector<16x16xf32>
    %59 = arith.divf %53, %58 : vector<16x16xf32>
    %60 = arith.truncf %59 : vector<16x16xf32> to vector<16x16xbf16>
    %c1 = arith.constant 1 : index
    %c0_22 = arith.constant 0 : index
    %c0_23 = arith.constant 0 : index
    %61 = vector.load %arg2[%c1, %c0_22, %c0_23] : memref<2x16x8xbf16, #tpu.memory_space<vmem>>, vector<1x16x8xbf16>
    %62 = vector.shape_cast %61 : vector<1x16x8xbf16> to vector<16x8xbf16>
    %cst_24 = arith.constant dense<0.000000e+00> : vector<16x8xf32>
    %63 = tpu.matmul %60, %62, %cst_24 {dimension_numbers = #tpu.dot_dimension_numbers<[1], [0], [0], [1], [0, 0, 1, 1], [], []>} : vector<16x16xbf16>, vector<16x8xbf16>, vector<16x8xf32> -> vector<16x8xf32>
    %cst_25 = arith.constant 0.000000e+00 : f32
    %64 = vector.broadcast %cst_25 : f32 to vector<16x8xf32>
    %65 = arith.maximumf %63, %64 : vector<16x8xf32>
    %66 = tpu.concatenate %35, %65 in 1 : vector<16x8xf32>, vector<16x8xf32> -> vector<16x16xf32>
    %c0_26 = arith.constant 0 : index
    %c0_27 = arith.constant 0 : index
    %67 = vector.load %arg5[%c0_26, %c0_27] : memref<16x16xf32, #tpu.memory_space<vmem>>, vector<16x16xf32>
    tpu.vector_store %arg5[%c0_26, %c0_27], %66 {strides = array<i32>} : memref<16x16xf32, #tpu.memory_space<vmem>>, vector<16x16xf32>,
    return
  }
  func.func @transform_0(%arg0: i32) -> (i32, i32) {
    %c0_i32 = arith.constant 0 : i32
    %c0_i32_0 = arith.constant 0 : i32
    return %arg0, %c0_i32 : i32, i32
  }
  func.func @transform_1(%arg0: i32) -> (i32, i32, i32) {
    %c0_i32 = arith.constant 0 : i32
    %c0_i32_0 = arith.constant 0 : i32
    %c0_i32_1 = arith.constant 0 : i32
    %c0_i32_2 = arith.constant 0 : i32
    return %c0_i32, %c0_i32_0, %c0_i32_1 : i32, i32, i32
  }
  func.func @transform_2(%arg0: i32) -> (i32, i32) {
    %c0_i32 = arith.constant 0 : i32
    %c0_i32_0 = arith.constant 0 : i32
    %c0_i32_1 = arith.constant 0 : i32
    return %c0_i32, %c0_i32_0 : i32, i32
  }
  func.func @transform_3(%arg0: i32) -> (i32, i32) {
    %c0_i32 = arith.constant 0 : i32
    %c0_i32_0 = arith.constant 0 : i32
    return %arg0, %c0_i32 : i32, i32
  }
  func.func @transform_4(%arg0: i32) -> (i32, i32) {
    %c0_i32 = arith.constant 0 : i32
    %c0_i32_0 = arith.constant 0 : i32
    return %arg0, %c0_i32 : i32, i32
  }
}

</mosaic_0001>

<llo_original>
// kernel: tpu_custom_call.1
$region0: #{tpu_custom_call.1}
  #allocation0 [shape = 'u32[]', space=smem, size = 0x4, offset = 0x4, fixed_abs, tag = 'smem constant byte address 0x4 - core index']
  #allocation1 [shape = 'u32[144,128]{1,0:T(1,128)}', space=vmem, size = 0x12000, scoped, tag = 'internal scratch']
  %s0 = inlined_call_operand.vmem [shape: bf16[16,16], index: 0, kind: input, shape index: {}]
  %s1 = inlined_call_operand.vmem [shape: bf16[2,16,8], index: 1, kind: input, shape index: {}]
  %s2 = inlined_call_operand.vmem [shape: f32[2,16], index: 2, kind: input, shape index: {}]
  %s3 = inlined_call_operand.vmem [shape: f32[16,2], index: 3, kind: input, shape index: {}]
  %s4 = inlined_call_operand.hbm [shape: f32[16,16], index: 4, kind: output, shape index: {}]
  %s5 = sld [smem:[#allocation0]]
  $region26: #{tpu_custom_call.1} parent=0
    _
  %s7 = ssub.s32 1, %s5
  %s8 = scalar_select 0, %s7, %s5
  $region1: #{tpu_custom_call.1} parent=0
    #allocation2 [shape = 'u8[8192]{0}', space=vmem, size = 0x2000, scoped, tag = 'output window, operand 0, single buffered']
    #allocation3 [shape = 's32[1]{0}', space=sflag, size = 0x4, scoped, tag = 'scoped memory for tpu_custom_call.1']
    %9 = vsyncpa [#allocation3], 0
    // Predicated region
    $region2: #{tpu_custom_call.1} parent=1 // pred_check
      _
    $region3: #{tpu_custom_call.1} parent=1 // pred_check_branch
      %11 = sbr.rel (0) target = $region5
    $region4: #{tpu_custom_call.1} parent=1 // pred_region
      _
    $region5: #{tpu_custom_call.1} parent=1 // pred_fallthru
      _
    // Predicated region
    $region6: #{tpu_custom_call.1} parent=1 // pred_check
      _
    $region7: #{tpu_custom_call.1} parent=1 // pred_check_branch
      %13 = sbr.rel (0) target = $region9
    $region8: #{tpu_custom_call.1} parent=1 // pred_region
      _
    $region9: #{tpu_custom_call.1} parent=1 // pred_fallthru
      _
    // Predicated region
    $region10: #{tpu_custom_call.1} parent=1 // pred_check
      _
    $region11: #{tpu_custom_call.1} parent=1 // pred_check_branch
      %15 = sbr.rel (0) target = $region13
    $region12: #{tpu_custom_call.1} parent=1 // pred_region
      _
    $region13: #{tpu_custom_call.1} parent=1 // pred_fallthru
      _
    // Predicated region
    $region14: #{tpu_custom_call.1} parent=1 // pred_check
      _
    $region15: #{tpu_custom_call.1} parent=1 // pred_check_branch
      %17 = sbr.rel (0) target = $region17
    $region16: #{tpu_custom_call.1} parent=1 // pred_region
      _
    $region17: #{tpu_custom_call.1} parent=1 // pred_fallthru
      _
    %v19 = vld [vmem:[%s0] sm:$0xf]
    %v20 = vld [vmem:[%s0 + $0x4] sm:$0xf]
    %v21 = vunpack.c.l.bf16 %v19
    %v22 = vunpack.c.l.bf16 %v20
    %vm23 = vcmp.gt.f32.partialorder %v21, 0.0
    %vm24 = vcmp.gt.f32.partialorder %v22, 0.0
    %v25 = vld [vmem:[%s2] sm:$0x3]
    %v26 = vld [vmem:[%s3] sm:$0xff]
    %v27 = vld [vmem:[%s3 + $0x8] sm:$0xff]
    %29 = vset.pattern.permute.xlu0 0
    %30 = vperm.xlu0 %29, %v26
    %v31 = vpop.permute.xlu0 %30
    %34 = vset.pattern.permute.xlu0 0
    %35 = vperm.xlu0 %34, %v27
    %v36 = vpop.permute.xlu0 %35
    %v38 = vlaneseq
    %v39 = vshrl.u32 %v38, 7
    %v40 = vsub.s32 0, %v39
    %v41 = vrot.slane %v25, %v40
    %v42 = vadd.f32 %v31, %v41
    %v43 = vadd.f32 %v36, %v41
    %vm44 = vcmp.ge.f32.partialorder %v42, 0.0
    %vm45 = vcmp.ge.f32.partialorder %v43, 0.0
    %v46 = vmul.f32 %v42, 0.01
    %v47 = vmul.f32 %v43, 0.01
    %v48 = vsel %vm44, %v42, %v46
    %v49 = vsel %vm45, %v43, %v47
    %v50 = vsel %vm23, %v48, -1e+30
    %v51 = vsel %vm24, %v49, -1e+30
    %vm52 = vcmask 130048
    %v53 = vsel %vm52, %v50, -inf
    %54 = vmax.xlane.f32.xlu0 %v53
    %v55 = vpop.xlane.xlu0 %54
    %v56 = vsel %vm52, %v51, -inf
    %57 = vmax.xlane.f32.xlu0 %v56
    %v58 = vpop.xlane.xlu0 %57
    %v59 = vsub.f32 %v50, %v55
    %v60 = vsub.f32 %v51, %v58
    %v61 = vmul.f32 %v59, 1.442695
    %v62 = vpow.pop %v61
    %v63 = vmul.f32 %v60, 1.442695
    %v64 = vpow.pop %v63
    %v65 = vmul.f32 %v62, %v21
    %v66 = vmul.f32 %v64, %v22
    %v67 = vsel %vm52, %v65, 0.0
    %68 = vadd.xlane.f32.xlu0 %v67
    %v69 = vpop.xlane.xlu0 %68
    %v70 = vsel %vm52, %v66, 0.0
    %71 = vadd.xlane.f32.xlu0 %v70
    %v72 = vpop.xlane.xlu0 %71
    %v73 = vmax.f32 %v69, 1e-30
    %v74 = vmax.f32 %v72, 1e-30
    %v75 = vrcp.pop %v73
    %v76 = vmul.f32 %v65, %v75
    %v77 = vrcp.pop %v74
    %v78 = vmul.f32 %v66, %v77
    %v79 = vpack.c.bf16 %v78, %v76
    %v80 = vld [vmem:[%s1] sm:$0xf]
    %v81 = vld [vmem:[%s1 + $0x4] sm:$0xf]
    %v84 = vunpack.c.l.b16 %v80
    %v85 = vunpack.c.l.b16 %v81
    %v86 = vpack.c.b16 %v85, %v84
    %v89 = vsel %vm52, %v79, 0
    %91 = vmatprep.subr.bf16.mxu0 0
    %92 = vmatpush1.bf16.msra.mxu0 %v86
    %93 = vmatprep.subr.bf16.mxu0 0
    %94 = vmatpush1.bf16.msra.mxu0 0
    %95 = vmatprep.subr.bf16.mxu0 0
    %96 = vmatpush1.bf16.msra.mxu0 0
    %97 = vmatprep.subr.bf16.mxu0 0
    %98 = vmatpush1.bf16.msra.mxu0 0
    %99 = vmatprep.subr.bf16.mxu0 0
    %100 = vmatpush1.bf16.msra.mxu0 0
    %101 = vmatprep.subr.bf16.mxu0 0
    %102 = vmatpush1.bf16.msra.mxu0 0
    %103 = vmatprep.subr.bf16.mxu0 0
    %104 = vmatpush1.bf16.msra.mxu0 0
    %105 = vmatprep.subr.bf16.mxu0 0
    %106 = vmatpush1.bf16.msra.mxu0 0
    %107 = vmatprep.subr.bf16.mxu0 0
    %108 = vmatpush1.bf16.msra.mxu0 0
    %109 = vmatprep.subr.bf16.mxu0 0
    %110 = vmatpush1.bf16.msra.mxu0 0
    %111 = vmatprep.subr.bf16.mxu0 0
    %112 = vmatpush1.bf16.msra.mxu0 0
    %113 = vmatprep.subr.bf16.mxu0 0
    %114 = vmatpush1.bf16.msra.mxu0 0
    %115 = vmatprep.subr.bf16.mxu0 0
    %116 = vmatpush1.bf16.msra.mxu0 0
    %117 = vmatprep.subr.bf16.mxu0 0
    %118 = vmatpush1.bf16.msra.mxu0 0
    %119 = vmatprep.subr.bf16.mxu0 0
    %120 = vmatpush1.bf16.msra.mxu0 0
    %121 = vmatprep.subr.bf16.mxu0 0
    %122 = vmatpush1.bf16.msra.mxu0 0
    %123 = vmatprep.mubr.bf16.mxu0 0
    %124 = vmatmul.mubr.bf16.gmra.mrb[0].mxu0 %v89
    %v125 = vpop.f32.mrb[0].mxu0
    %v126 = vadd.f32 0.0, %v125
    %v127 = vpop.f32.mrb[0].mxu0
    %v128 = vpop.f32.mrb[0].mxu0
    %v129 = vadd.f32 0.0, %v128
    %v130 = vpop.f32.mrb[0].mxu0
    %131 = vdwg.mxu0
    %v132 = vmax.f32 %v126, 0.0
    %v133 = vmax.f32 %v129, 0.0
    %134 = vset.pattern.permute.xlu0 1
    %135 = vperm.xlu0 %134, %v26
    %v136 = vpop.permute.xlu0 %135
    %138 = vset.pattern.permute.xlu0 1
    %139 = vperm.xlu0 %138, %v27
    %v140 = vpop.permute.xlu0 %139
    %v142 = vlaneseq
    %v143 = vshrl.u32 %v142, 7
    %v144 = vsub.s32 1, %v143
    %v145 = vrot.slane %v25, %v144
    %v146 = vadd.f32 %v136, %v145
    %v147 = vadd.f32 %v140, %v145
    %vm148 = vcmp.ge.f32.partialorder %v146, 0.0
    %vm149 = vcmp.ge.f32.partialorder %v147, 0.0
    %v150 = vmul.f32 %v146, 0.01
    %v151 = vmul.f32 %v147, 0.01
    %v152 = vsel %vm148, %v146, %v150
    %v153 = vsel %vm149, %v147, %v151
    %v154 = vsel %vm23, %v152, -1e+30
    %v155 = vsel %vm24, %v153, -1e+30
    %v156 = vsel %vm52, %v154, -inf
    %157 = vmax.xlane.f32.xlu0 %v156
    %v158 = vpop.xlane.xlu0 %157
    %v159 = vsel %vm52, %v155, -inf
    %160 = vmax.xlane.f32.xlu0 %v159
    %v161 = vpop.xlane.xlu0 %160
    %v162 = vsub.f32 %v154, %v158
    %v163 = vsub.f32 %v155, %v161
    %v164 = vmul.f32 %v162, 1.442695
    %v165 = vpow.pop %v164
    %v166 = vmul.f32 %v163, 1.442695
    %v167 = vpow.pop %v166
    %v168 = vmul.f32 %v165, %v21
    %v169 = vmul.f32 %v167, %v22
    %v170 = vsel %vm52, %v168, 0.0
    %171 = vadd.xlane.f32.xlu0 %v170
    %v172 = vpop.xlane.xlu0 %171
    %v173 = vsel %vm52, %v169, 0.0
    %174 = vadd.xlane.f32.xlu0 %v173
    %v175 = vpop.xlane.xlu0 %174
    %v176 = vmax.f32 %v172, 1e-30
    %v177 = vmax.f32 %v175, 1e-30
    %v178 = vrcp.pop %v176
    %v179 = vmul.f32 %v168, %v178
    %v180 = vrcp.pop %v177
    %v181 = vmul.f32 %v169, %v180
    %v182 = vpack.c.bf16 %v181, %v179
    %s183 = scalar_lea.vmem %s1, 8
    %v184 = vld [vmem:[%s183] sm:$0xf]
    %v185 = vld [vmem:[%s183 + $0x4] sm:$0xf]
    %v188 = vunpack.c.l.b16 %v184
    %v189 = vunpack.c.l.b16 %v185
    %v190 = vpack.c.b16 %v189, %v188
    %v193 = vsel %vm52, %v182, 0
    %195 = vmatprep.subr.bf16.mxu0 0
    %196 = vmatpush1.bf16.msra.mxu0 %v190
    %197 = vmatprep.subr.bf16.mxu0 0
    %198 = vmatpush1.bf16.msra.mxu0 0
    %199 = vmatprep.subr.bf16.mxu0 0
    %200 = vmatpush1.bf16.msra.mxu0 0
    %201 = vmatprep.subr.bf16.mxu0 0
    %202 = vmatpush1.bf16.msra.mxu0 0
    %203 = vmatprep.subr.bf16.mxu0 0
    %204 = vmatpush1.bf16.msra.mxu0 0
    %205 = vmatprep.subr.bf16.mxu0 0
    %206 = vmatpush1.bf16.msra.mxu0 0
    %207 = vmatprep.subr.bf16.mxu0 0
    %208 = vmatpush1.bf16.msra.mxu0 0
    %209 = vmatprep.subr.bf16.mxu0 0
    %210 = vmatpush1.bf16.msra.mxu0 0
    %211 = vmatprep.subr.bf16.mxu0 0
    %212 = vmatpush1.bf16.msra.mxu0 0
    %213 = vmatprep.subr.bf16.mxu0 0
    %214 = vmatpush1.bf16.msra.mxu0 0
    %215 = vmatprep.subr.bf16.mxu0 0
    %216 = vmatpush1.bf16.msra.mxu0 0
    %217 = vmatprep.subr.bf16.mxu0 0
    %218 = vmatpush1.bf16.msra.mxu0 0
    %219 = vmatprep.subr.bf16.mxu0 0
    %220 = vmatpush1.bf16.msra.mxu0 0
    %221 = vmatprep.subr.bf16.mxu0 0
    %222 = vmatpush1.bf16.msra.mxu0 0
    %223 = vmatprep.subr.bf16.mxu0 0
    %224 = vmatpush1.bf16.msra.mxu0 0
    %225 = vmatprep.subr.bf16.mxu0 0
    %226 = vmatpush1.bf16.msra.mxu0 0
    %227 = vmatprep.mubr.bf16.mxu0 0
    %228 = vmatmul.mubr.bf16.gmra.mrb[0].mxu0 %v193
    %v229 = vpop.f32.mrb[0].mxu0
    %v230 = vadd.f32 0.0, %v229
    %v231 = vpop.f32.mrb[0].mxu0
    %v232 = vpop.f32.mrb[0].mxu0
    %v233 = vadd.f32 0.0, %v232
    %v234 = vpop.f32.mrb[0].mxu0
    %235 = vdwg.mxu0
    %v236 = vmax.f32 %v230, 0.0
    %v237 = vmax.f32 %v233, 0.0
    %240 = vrot.lane.b32.xlu0 %v236, 8
    %v241 = vpop.permute.xlu0 %240
    %242 = vrot.lane.b32.xlu0 %v237, 8
    %v243 = vpop.permute.xlu0 %242
    %vm246 = vcmask 64512
    %v247 = vsel %vm246, %v132, %v241
    %v248 = vsel %vm246, %v133, %v243
    %249 = vst.msk [vmem:[#allocation2] sm:$0xff] %vm52, %v247
    %250 = vst.msk [vmem:[#allocation2 + $0x8] sm:$0xff] %vm52, %v248
    // Predicated region
    $region18: #{tpu_custom_call.1} parent=1 // pred_check
      _
    $region19: #{tpu_custom_call.1} parent=1 // pred_check_branch
      %252 = sbr.rel (0) target = $region21
    $region20: #{tpu_custom_call.1} parent=1 // pred_region
      %s254 = ssub.s32 256, 256
      %255 = vsyncadd [#allocation3], %s254
      %s256 = sshll.u32 [#allocation2], 4
      %s257 = int_to_ptr.vmem [resolvable:$true] %s256
      %262 = dma.vmem_to_hbm [thread:$0]  %s257, 256, %s4, [#allocation3], 128, 128, 8
    $region21: #{tpu_custom_call.1} parent=1 // pred_fallthru
      _
    // Predicated region
    $region22: #{tpu_custom_call.1} parent=1 // pred_check
      _
    $region23: #{tpu_custom_call.1} parent=1 // pred_check_branch
      %264 = sbr.rel (0) target = $region25
    $region24: #{tpu_custom_call.1} parent=1 // pred_region
      %265 = dma.done [#allocation3], 256
    $region25: #{tpu_custom_call.1} parent=1 // pred_fallthru
      _
    %266 = vsyncpa [#allocation3], 1

</llo_original>
